<compile_context>
chip_gen: v5e
topology: v5e:2x2
jax: 0.10.0
libtpu: 0.0.40
codegen_flags: <defaults>
</compile_context>

<pallas_src>
import jax
import jax.numpy as jnp
from jax.experimental import pallas as pl
from jax.experimental.pallas import tpu as pltpu

IN_DIM, H1_DIM, H2_DIM, OUT_DIM = 93, 50, 25, 9


def _mlp_kernel(x_ref, w1_ref, b1_ref, w2_ref, b2_ref, w3_ref, b3_ref, o_ref):
    # x_ref: (TM, 93) f32 tile; weights bf16, biases f32; output f32.
    x = x_ref[...].astype(jnp.bfloat16)          # in-kernel cast: VPU slot is free
    h1 = jnp.dot(x, w1_ref[...], preferred_element_type=jnp.float32) + b1_ref[...]
    h1 = jnp.maximum(h1, 0.0)                    # f32 ReLU (v5e VPU has no bf16)
    h2 = jnp.dot(h1.astype(jnp.bfloat16), w2_ref[...],
                 preferred_element_type=jnp.float32) + b2_ref[...]
    h2 = jnp.maximum(h2, 0.0)
    h3 = jnp.dot(h2.astype(jnp.bfloat16), w3_ref[...],
                 preferred_element_type=jnp.float32) + b3_ref[...]
    # TODO(synk): on v5e, chunk the tile in an unrolled fori_loop so h1/h2 stay
    # in vregs instead of lane-padded VMEM temporaries (verify via bundle dump).
    # Output last dim is 9 (<128 lanes) -> masked stores; accepted since writes
    # are ~10% of traffic and the consumer expects an (N, 9) f32 layout.
    o_ref[...] = h3.astype(o_ref.dtype)


def mlp_forward(x, params, *, tm_max=1024):
    """x: any shape reshapeable to (-1, 93). Returns (N, 9) float32."""
    w1, b1, w2, b2, w3, b3 = params
    x2d = x.reshape(-1, IN_DIM).astype(jnp.float32)
    n = x2d.shape[0]

    # bf16 matmul operands (f32 accumulate in-kernel); biases stay f32.
    w1b, w2b, w3b = (w.astype(jnp.bfloat16) for w in (w1, w2, w3))
    b1f, b2f, b3f = (b.astype(jnp.float32) for b in (b1, b2, b3))

    # Batch tile: clamp user value to a multiple of 8 sublanes (f32 x tile);
    # when large, round down to a multiple of 256 (MXU row granularity). At
    # ~1K rows the double-buffered footprint is a few MiB — safe on v7x's
    # 64 MiB VMEM — while >=512-row tiles already sit at ~85% of HBM roofline.
    tm_max = max(8, (int(tm_max) // 8) * 8)
    tm = min(tm_max, ((n + 7) // 8) * 8)
    if tm >= 256:
        tm = (tm // 256) * 256
    grid = (pl.cdiv(n, tm),)

    # Weights/biases: whole-array blocks with a constant index_map -> DMA'd once
    # and VMEM-resident for the whole sweep (<25 KiB total).
    const = lambda a: pl.BlockSpec(a.shape, lambda i: (0,) * a.ndim)

    flops = 2 * (IN_DIM * H1_DIM + H1_DIM * H2_DIM + H2_DIM * OUT_DIM) * n
    bytes_accessed = n * (IN_DIM * 4 + OUT_DIM * 4) + sum(
        a.size * a.dtype.itemsize for a in (w1b, b1f, w2b, b2f, w3b, b3f))

    return pl.pallas_call(
        _mlp_kernel,
        out_shape=jax.ShapeDtypeStruct((n, OUT_DIM), jnp.float32),
        grid_spec=pltpu.PrefetchScalarGridSpec(
            num_scalar_prefetch=0,
            grid=grid,
            in_specs=[
                pl.BlockSpec((tm, IN_DIM), lambda i: (i, 0)),   # x: tiled over batch
                const(w1b), const(b1f),
                const(w2b), const(b2f),
                const(w3b), const(b3f),
            ],
            out_specs=pl.BlockSpec((tm, OUT_DIM), lambda i: (i, 0)),
        ),
        compiler_params=pltpu.CompilerParams(
            dimension_semantics=("parallel",)),          # shards grid across v7x's 2 TCs
        cost_estimate=pl.CostEstimate(
            flops=flops, transcendentals=0, bytes_accessed=bytes_accessed),
    )(x2d, w1b, b1f, w2b, b2f, w3b, b3f)


def init_params(key):
    """Deterministic init mirroring torch.nn.Linear default (uniform +-1/sqrt(fan_in)).
    Weights stored transposed: (in_features, out_features)."""
    dims = [(IN_DIM, H1_DIM), (H1_DIM, H2_DIM), (H2_DIM, OUT_DIM)]
    params = []
    for (fan_in, fan_out) in dims:
        key, kw, kb = jax.random.split(key, 3)
        bound = 1.0 / jnp.sqrt(jnp.float32(fan_in))
        w = jax.random.uniform(kw, (fan_in, fan_out), jnp.float32, -bound, bound)
        b = jax.random.uniform(kb, (1, fan_out), jnp.float32, -bound, bound)
        params.extend([w, b])
    return tuple(params)


def _reference(x, params):
    """Plain-JAX reference with identical bf16 operand casts / f32 accumulation."""
    w1, b1, w2, b2, w3, b3 = params
    xb = x.reshape(-1, IN_DIM).astype(jnp.float32).astype(jnp.bfloat16)
    w1b, w2b, w3b = (w.astype(jnp.bfloat16) for w in (w1, w2, w3))
    h1 = jnp.maximum(
        jnp.dot(xb, w1b, preferred_element_type=jnp.float32) + b1, 0.0)
    h2 = jnp.maximum(
        jnp.dot(h1.astype(jnp.bfloat16), w2b, preferred_element_type=jnp.float32) + b2,
        0.0)
    return jnp.dot(h2.astype(jnp.bfloat16), w3b,
                   preferred_element_type=jnp.float32) + b3


if __name__ == "__main__":
    key = jax.random.PRNGKey(0)
    kx, kx2, kp = jax.random.split(key, 3)
    params = init_params(kp)

    # Small primary check: batch=8, features=93 (single tile, whole batch).
    x = jax.random.normal(kx, (8, IN_DIM), jnp.float32)
    out = mlp_forward(x, params)
    jax.block_until_ready(out)
    assert out.shape == (8, OUT_DIM)
    ref = _reference(x, params)
    assert jnp.allclose(out, ref, atol=1e-3, rtol=1e-3)

    # Secondary check: multi-block grid with a ragged last tile (520 rows,
    # TM=256 -> 3 grid steps), exercising the pipelined path and view(-1, 93).
    x2 = jax.random.normal(kx2, (2, 260, IN_DIM), jnp.float32)
    out2 = mlp_forward(x2, params, tm_max=256)
    jax.block_until_ready(out2)
    assert out2.shape == (520, OUT_DIM)
    ref2 = _reference(x2, params)
    assert jnp.allclose(out2, ref2, atol=1e-3, rtol=1e-3)

    print("KERNEL_OK")
</pallas_src>

<mosaic_0001>
module attributes {stable_mosaic.version = 11 : i64} {
  func.func @_mlp_kernel(%arg0: i32, %arg1: memref<8x93xf32, #tpu.memory_space<vmem>>, %arg2: memref<93x50xbf16, #tpu.memory_space<vmem>>, %arg3: memref<1x50xf32, #tpu.memory_space<vmem>>, %arg4: memref<50x25xbf16, #tpu.memory_space<vmem>>, %arg5: memref<1x25xf32, #tpu.memory_space<vmem>>, %arg6: memref<25x9xbf16, #tpu.memory_space<vmem>>, %arg7: memref<1x9xf32, #tpu.memory_space<vmem>>, %arg8: memref<8x9xf32, #tpu.memory_space<vmem>>) attributes {dimension_semantics = [#tpu.dimension_semantics<parallel>], iteration_bounds = array<i64: 1>, scalar_prefetch = 0 : i64, scratch_operands = 0 : i64, tpu.core_type = #tpu.core_type<tc>, window_params = [{transform_indices = @transform_0, window_bounds = array<i64: 8, 93>}, {pipeline_mode = #tpu.pipeline_mode<synchronous>, transform_indices = @transform_1, window_bounds = array<i64: 93, 50>}, {pipeline_mode = #tpu.pipeline_mode<synchronous>, transform_indices = @transform_2, window_bounds = array<i64: 1, 50>}, {pipeline_mode = #tpu.pipeline_mode<synchronous>, transform_indices = @transform_3, window_bounds = array<i64: 50, 25>}, {pipeline_mode = #tpu.pipeline_mode<synchronous>, transform_indices = @transform_4, window_bounds = array<i64: 1, 25>}, {pipeline_mode = #tpu.pipeline_mode<synchronous>, transform_indices = @transform_5, window_bounds = array<i64: 25, 9>}, {pipeline_mode = #tpu.pipeline_mode<synchronous>, transform_indices = @transform_6, window_bounds = array<i64: 1, 9>}, {transform_indices = @transform_7, window_bounds = array<i64: 8, 9>}]} {
    %c0 = arith.constant 0 : index
    %c0_0 = arith.constant 0 : index
    %0 = vector.load %arg1[%c0, %c0_0] : memref<8x93xf32, #tpu.memory_space<vmem>>, vector<8x93xf32>
    %1 = arith.truncf %0 : vector<8x93xf32> to vector<8x93xbf16>
    %c0_1 = arith.constant 0 : index
    %c0_2 = arith.constant 0 : index
    %2 = vector.load %arg2[%c0_1, %c0_2] : memref<93x50xbf16, #tpu.memory_space<vmem>>, vector<93x50xbf16>
    %cst = arith.constant dense<0.000000e+00> : vector<8x50xf32>
    %3 = tpu.matmul %1, %2, %cst {dimension_numbers = #tpu.dot_dimension_numbers<[1], [0], [0], [1], [0, 0, 1, 1], [], []>} : vector<8x93xbf16>, vector<93x50xbf16>, vector<8x50xf32> -> vector<8x50xf32>
    %c0_3 = arith.constant 0 : index
    %c0_4 = arith.constant 0 : index
    %4 = vector.load %arg3[%c0_3, %c0_4] : memref<1x50xf32, #tpu.memory_space<vmem>>, vector<1x50xf32>
    %5 = vector.broadcast %4 : vector<1x50xf32> to vector<8x50xf32>
    %6 = arith.addf %3, %5 : vector<8x50xf32>
    %cst_5 = arith.constant 0.000000e+00 : f32
    %7 = vector.broadcast %cst_5 : f32 to vector<8x50xf32>
    %8 = arith.maximumf %6, %7 : vector<8x50xf32>
    %9 = arith.truncf %8 : vector<8x50xf32> to vector<8x50xbf16>
    %c0_6 = arith.constant 0 : index
    %c0_7 = arith.constant 0 : index
    %10 = vector.load %arg4[%c0_6, %c0_7] : memref<50x25xbf16, #tpu.memory_space<vmem>>, vector<50x25xbf16>
    %cst_8 = arith.constant dense<0.000000e+00> : vector<8x25xf32>
    %11 = tpu.matmul %9, %10, %cst_8 {dimension_numbers = #tpu.dot_dimension_numbers<[1], [0], [0], [1], [0, 0, 1, 1], [], []>} : vector<8x50xbf16>, vector<50x25xbf16>, vector<8x25xf32> -> vector<8x25xf32>
    %c0_9 = arith.constant 0 : index
    %c0_10 = arith.constant 0 : index
    %12 = vector.load %arg5[%c0_9, %c0_10] : memref<1x25xf32, #tpu.memory_space<vmem>>, vector<1x25xf32>
    %13 = vector.broadcast %12 : vector<1x25xf32> to vector<8x25xf32>
    %14 = arith.addf %11, %13 : vector<8x25xf32>
    %cst_11 = arith.constant 0.000000e+00 : f32
    %15 = vector.broadcast %cst_11 : f32 to vector<8x25xf32>
    %16 = arith.maximumf %14, %15 : vector<8x25xf32>
    %17 = arith.truncf %16 : vector<8x25xf32> to vector<8x25xbf16>
    %c0_12 = arith.constant 0 : index
    %c0_13 = arith.constant 0 : index
    %18 = vector.load %arg6[%c0_12, %c0_13] : memref<25x9xbf16, #tpu.memory_space<vmem>>, vector<25x9xbf16>
    %cst_14 = arith.constant dense<0.000000e+00> : vector<8x9xf32>
    %19 = tpu.matmul %17, %18, %cst_14 {dimension_numbers = #tpu.dot_dimension_numbers<[1], [0], [0], [1], [0, 0, 1, 1], [], []>} : vector<8x25xbf16>, vector<25x9xbf16>, vector<8x9xf32> -> vector<8x9xf32>
    %c0_15 = arith.constant 0 : index
    %c0_16 = arith.constant 0 : index
    %20 = vector.load %arg7[%c0_15, %c0_16] : memref<1x9xf32, #tpu.memory_space<vmem>>, vector<1x9xf32>
    %21 = vector.broadcast %20 : vector<1x9xf32> to vector<8x9xf32>
    %22 = arith.addf %19, %21 : vector<8x9xf32>
    %c0_17 = arith.constant 0 : index
    %c0_18 = arith.constant 0 : index
    %23 = vector.load %arg8[%c0_17, %c0_18] : memref<8x9xf32, #tpu.memory_space<vmem>>, vector<8x9xf32>
    tpu.vector_store %arg8[%c0_17, %c0_18], %22 {strides = array<i32>} : memref<8x9xf32, #tpu.memory_space<vmem>>, vector<8x9xf32>,
    return
  }
  func.func @transform_0(%arg0: i32) -> (i32, i32) {
    %c0_i32 = arith.constant 0 : i32
    %c0_i32_0 = arith.constant 0 : i32
    return %arg0, %c0_i32 : i32, i32
  }
  func.func @transform_1(%arg0: i32) -> (i32, i32) {
    %c0_i32 = arith.constant 0 : i32
    %c0_i32_0 = arith.constant 0 : i32
    %c0_i32_1 = arith.constant 0 : i32
    return %c0_i32, %c0_i32_0 : i32, i32
  }
  func.func @transform_2(%arg0: i32) -> (i32, i32) {
    %c0_i32 = arith.constant 0 : i32
    %c0_i32_0 = arith.constant 0 : i32
    %c0_i32_1 = arith.constant 0 : i32
    return %c0_i32, %c0_i32_0 : i32, i32
  }
  func.func @transform_3(%arg0: i32) -> (i32, i32) {
    %c0_i32 = arith.constant 0 : i32
    %c0_i32_0 = arith.constant 0 : i32
    %c0_i32_1 = arith.constant 0 : i32
    return %c0_i32, %c0_i32_0 : i32, i32
  }
  func.func @transform_4(%arg0: i32) -> (i32, i32) {
    %c0_i32 = arith.constant 0 : i32
    %c0_i32_0 = arith.constant 0 : i32
    %c0_i32_1 = arith.constant 0 : i32
    return %c0_i32, %c0_i32_0 : i32, i32
  }
  func.func @transform_5(%arg0: i32) -> (i32, i32) {
    %c0_i32 = arith.constant 0 : i32
    %c0_i32_0 = arith.constant 0 : i32
    %c0_i32_1 = arith.constant 0 : i32
    return %c0_i32, %c0_i32_0 : i32, i32
  }
  func.func @transform_6(%arg0: i32) -> (i32, i32) {
    %c0_i32 = arith.constant 0 : i32
    %c0_i32_0 = arith.constant 0 : i32
    %c0_i32_1 = arith.constant 0 : i32
    return %c0_i32, %c0_i32_0 : i32, i32
  }
  func.func @transform_7(%arg0: i32) -> (i32, i32) {
    %c0_i32 = arith.constant 0 : i32
    %c0_i32_0 = arith.constant 0 : i32
    return %arg0, %c0_i32 : i32, i32
  }
}

</mosaic_0001>

<llo_original>
// kernel: tpu_custom_call.1
$region0: #{tpu_custom_call.1}
  #allocation0 [shape = 'u32[]', space=smem, size = 0x4, offset = 0x4, fixed_abs, tag = 'smem constant byte address 0x4 - core index']
  #allocation1 [shape = 'u32[72,128]{1,0:T(1,128)}', space=vmem, size = 0x9000, scoped, tag = 'internal scratch']
  %s0 = inlined_call_operand.vmem [shape: f32[8,93], index: 0, kind: input, shape index: {}]
  %s1 = inlined_call_operand.vmem [shape: bf16[93,50], index: 1, kind: input, shape index: {}]
  %s2 = inlined_call_operand.vmem [shape: f32[1,50], index: 2, kind: input, shape index: {}]
  %s3 = inlined_call_operand.vmem [shape: bf16[50,25], index: 3, kind: input, shape index: {}]
  %s4 = inlined_call_operand.vmem [shape: f32[1,25], index: 4, kind: input, shape index: {}]
  %s5 = inlined_call_operand.vmem [shape: bf16[25,9], index: 5, kind: input, shape index: {}]
  %s6 = inlined_call_operand.vmem [shape: f32[1,9], index: 6, kind: input, shape index: {}]
  %s7 = inlined_call_operand.hbm [shape: f32[8,9], index: 7, kind: output, shape index: {}]
  %s8 = sld [smem:[#allocation0]]
  $region38: #{tpu_custom_call.1} parent=0
    _
  %s10 = ssub.s32 1, %s8
  %s11 = scalar_select 0, %s10, %s8
  $region1: #{tpu_custom_call.1} parent=0
    #allocation2 [shape = 'u8[4096]{0}', space=vmem, size = 0x1000, scoped, tag = 'output window, operand 0, single buffered']
    #allocation3 [shape = 's32[1]{0}', space=sflag, size = 0x4, scoped, tag = 'scoped memory for tpu_custom_call.1']
    %12 = vsyncpa [#allocation3], 0
    // Predicated region
    $region2: #{tpu_custom_call.1} parent=1 // pred_check
      _
    $region3: #{tpu_custom_call.1} parent=1 // pred_check_branch
      %14 = sbr.rel (0) target = $region5
    $region4: #{tpu_custom_call.1} parent=1 // pred_region
      _
    $region5: #{tpu_custom_call.1} parent=1 // pred_fallthru
      _
    // Predicated region
    $region6: #{tpu_custom_call.1} parent=1 // pred_check
      _
    $region7: #{tpu_custom_call.1} parent=1 // pred_check_branch
      %16 = sbr.rel (0) target = $region9
    $region8: #{tpu_custom_call.1} parent=1 // pred_region
      _
    $region9: #{tpu_custom_call.1} parent=1 // pred_fallthru
      _
    // Predicated region
    $region10: #{tpu_custom_call.1} parent=1 // pred_check
      _
    $region11: #{tpu_custom_call.1} parent=1 // pred_check_branch
      %18 = sbr.rel (0) target = $region13
    $region12: #{tpu_custom_call.1} parent=1 // pred_region
      _
    $region13: #{tpu_custom_call.1} parent=1 // pred_fallthru
      _
    // Predicated region
    $region14: #{tpu_custom_call.1} parent=1 // pred_check
      _
    $region15: #{tpu_custom_call.1} parent=1 // pred_check_branch
      %20 = sbr.rel (0) target = $region17
    $region16: #{tpu_custom_call.1} parent=1 // pred_region
      _
    $region17: #{tpu_custom_call.1} parent=1 // pred_fallthru
      _
    // Predicated region
    $region18: #{tpu_custom_call.1} parent=1 // pred_check
      _
    $region19: #{tpu_custom_call.1} parent=1 // pred_check_branch
      %22 = sbr.rel (0) target = $region21
    $region20: #{tpu_custom_call.1} parent=1 // pred_region
      _
    $region21: #{tpu_custom_call.1} parent=1 // pred_fallthru
      _
    // Predicated region
    $region22: #{tpu_custom_call.1} parent=1 // pred_check
      _
    $region23: #{tpu_custom_call.1} parent=1 // pred_check_branch
      %24 = sbr.rel (0) target = $region25
    $region24: #{tpu_custom_call.1} parent=1 // pred_region
      _
    $region25: #{tpu_custom_call.1} parent=1 // pred_fallthru
      _
    // Predicated region
    $region26: #{tpu_custom_call.1} parent=1 // pred_check
      _
    $region27: #{tpu_custom_call.1} parent=1 // pred_check_branch
      %26 = sbr.rel (0) target = $region29
    $region28: #{tpu_custom_call.1} parent=1 // pred_region
      _
    $region29: #{tpu_custom_call.1} parent=1 // pred_fallthru
      _
    %v28 = vld [vmem:[%s0] sm:$0xff]
    %v29 = vpack.c.bf16 %v28, %v28
    %v30 = vld [vmem:[%s1] sm:$0xf]
    %v31 = vld [vmem:[%s1 + $0x4] sm:$0xf]
    %v32 = vld [vmem:[%s1 + $0x8] sm:$0xf]
    %v33 = vld [vmem:[%s1 + $0xc] sm:$0xf]
    %v34 = vld [vmem:[%s1 + $0x10] sm:$0xf]
    %v35 = vld [vmem:[%s1 + $0x14] sm:$0xf]
    %v36 = vld [vmem:[%s1 + $0x18] sm:$0xf]
    %v37 = vld [vmem:[%s1 + $0x1c] sm:$0xf]
    %v38 = vld [vmem:[%s1 + $0x20] sm:$0xf]
    %v39 = vld [vmem:[%s1 + $0x24] sm:$0xf]
    %v40 = vld [vmem:[%s1 + $0x28] sm:$0xf]
    %v41 = vld [vmem:[%s1 + $0x2c] sm:$0x7]
    %v42 = vld [vmem:[%s2] sm:$0x1]
    %v44 = vperm.slane %v42, 0
    %v58 = vunpack.c.l.b16 %v30
    %v59 = vunpack.c.l.b16 %v31
    %v60 = vunpack.c.l.b16 %v32
    %v61 = vunpack.c.l.b16 %v33
    %v62 = vunpack.c.l.b16 %v34
    %v63 = vunpack.c.l.b16 %v35
    %v64 = vunpack.c.l.b16 %v36
    %v65 = vunpack.c.l.b16 %v37
    %v66 = vunpack.c.l.b16 %v38
    %v67 = vunpack.c.l.b16 %v39
    %v68 = vunpack.c.l.b16 %v40
    %v69 = vunpack.c.l.b16 %v41
    %v70 = vpack.c.b16 %v59, %v58
    %v71 = vpack.c.b16 %v61, %v60
    %v72 = vpack.c.b16 %v63, %v62
    %v73 = vpack.c.b16 %v65, %v64
    %v74 = vpack.c.b16 %v67, %v66
    %v75 = vpack.c.b16 %v69, %v68
    %vm81 = vcmask 760832
    %v83 = vsel %vm81, %v29, 0
    %vm85 = vcmask 1045504
    %vm86 = vcmask 1046528
    %v87 = vsel %vm85, 4294967295, 65535
    %v88 = vsel %vm86, %v87, 0
    %v90 = vand.u32 %v75, %v88
    %92 = vmatpush.bf16.msra.mxu0 0
    %93 = vmatpush.bf16.msra.mxu0 0
    %94 = vmatpush.bf16.msra.mxu0 %v90
    %95 = vmatpush.bf16.msra.mxu0 %v74
    %96 = vmatpush.bf16.msra.mxu0 %v73
    %97 = vmatpush.bf16.msra.mxu0 %v72
    %98 = vmatpush.bf16.msra.mxu0 %v71
    %99 = vmatpush.bf16.msra.mxu0 %v70
    %100 = vmatmul.bf16.gmra.mxu0 %v83
    %v101 = vpop.f32.mrf.mxu0
    %v102 = vadd.f32 %v44, %v101
    %v103 = vpop.f32.mrf.mxu0
    %104 = vdwg.mxu0
    %v105 = vmax.f32 %v102, 0.0
    %v106 = vpack.c.bf16 %v105, %v105
    %v107 = vld [vmem:[%s3] sm:$0xf]
    %v108 = vld [vmem:[%s3 + $0x4] sm:$0xf]
    %v109 = vld [vmem:[%s3 + $0x8] sm:$0xf]
    %v110 = vld [vmem:[%s3 + $0xc] sm:$0xf]
    %v111 = vld [vmem:[%s3 + $0x10] sm:$0xf]
    %v112 = vld [vmem:[%s3 + $0x14] sm:$0xf]
    %v113 = vld [vmem:[%s3 + $0x18] sm:$0x1]
    %v114 = vld [vmem:[%s4] sm:$0x1]
    %v116 = vperm.slane %v114, 0
    %v125 = vunpack.c.l.b16 %v107
    %v126 = vunpack.c.l.b16 %v108
    %v127 = vunpack.c.l.b16 %v109
    %v128 = vunpack.c.l.b16 %v110
    %v129 = vunpack.c.l.b16 %v111
    %v130 = vunpack.c.l.b16 %v112
    %v131 = vunpack.c.l.b16 %v113
    %v132 = vpack.c.b16 %v126, %v125
    %v133 = vpack.c.b16 %v128, %v127
    %v134 = vpack.c.b16 %v130, %v129
    %v135 = vpack.c.b16 %v131, %v131
    %vm139 = vcmask 408576
    %v141 = vsel %vm139, %v106, 0
    %vm143 = vcmask 1040384
    %v145 = vsel %vm143, %v135, 0
    %147 = vmatpush.bf16.msra.mxu0 0
    %148 = vmatpush.bf16.msra.mxu0 0
    %149 = vmatpush.bf16.msra.mxu0 0
    %150 = vmatpush.bf16.msra.mxu0 0
    %151 = vmatpush.bf16.msra.mxu0 %v145
    %152 = vmatpush.bf16.msra.mxu0 %v134
    %153 = vmatpush.bf16.msra.mxu0 %v133
    %154 = vmatpush.bf16.msra.mxu0 %v132
    %155 = vmatmul.bf16.gmra.mxu0 %v141
    %v156 = vpop.f32.mrf.mxu0
    %v157 = vadd.f32 %v116, %v156
    %v158 = vpop.f32.mrf.mxu0
    %159 = vdwg.mxu0
    %v160 = vmax.f32 %v157, 0.0
    %v161 = vpack.c.bf16 %v160, %v160
    %v162 = vld [vmem:[%s5] sm:$0xf]
    %v163 = vld [vmem:[%s5 + $0x4] sm:$0xf]
    %v164 = vld [vmem:[%s5 + $0x8] sm:$0xf]
    %v165 = vld [vmem:[%s5 + $0xc] sm:$0x1]
    %v166 = vld [vmem:[%s6] sm:$0x1]
    %v168 = vperm.slane %v166, 0
    %v174 = vunpack.c.l.b16 %v162
    %v175 = vunpack.c.l.b16 %v163
    %v176 = vunpack.c.l.b16 %v164
    %v177 = vunpack.c.l.b16 %v165
    %v178 = vpack.c.b16 %v175, %v174
    %v179 = vpack.c.b16 %v177, %v176
    %vm181 = vcmask 203776
    %v183 = vsel %vm181, %v161, 0
    %vm185 = vcmask 1043456
    %vm186 = vcmask 1044480
    %v187 = vsel %vm185, 4294967295, 65535
    %v188 = vsel %vm186, %v187, 0
    %v190 = vand.u32 %v179, %v188
    %192 = vmatpush.bf16.msra.mxu0 0
    %193 = vmatpush.bf16.msra.mxu0 0
    %194 = vmatpush.bf16.msra.mxu0 0
    %195 = vmatpush.bf16.msra.mxu0 0
    %196 = vmatpush.bf16.msra.mxu0 0
    %197 = vmatpush.bf16.msra.mxu0 0
    %198 = vmatpush.bf16.msra.mxu0 %v190
    %199 = vmatpush.bf16.msra.mxu0 %v178
    %200 = vmatmul.bf16.gmra.mxu0 %v183
    %v201 = vpop.f32.mrf.mxu0
    %v202 = vadd.f32 %v168, %v201
    %v203 = vpop.f32.mrf.mxu0
    %204 = vdwg.mxu0
    %vm205 = vcmask 72704
    %206 = vst.msk [vmem:[#allocation2] sm:$0xff] %vm205, %v202
    // Predicated region
    $region30: #{tpu_custom_call.1} parent=1 // pred_check
      _
    $region31: #{tpu_custom_call.1} parent=1 // pred_check_branch
      %208 = sbr.rel (0) target = $region33
    $region32: #{tpu_custom_call.1} parent=1 // pred_region
      %210 = vsyncadd [#allocation3], 0
      %s212 = sshll.u32 [#allocation2], 4
      %s213 = int_to_ptr.vmem [resolvable:$true] %s212
      %s214 = sshll.u32 %s7, 4
      %s215 = int_to_ptr.hbm [resolvable:$true] %s214
      %217 = dma.vmem_to_hbm [thread:$0]  %s213, 128, %s215, [#allocation3]
    $region33: #{tpu_custom_call.1} parent=1 // pred_fallthru
      _
    // Predicated region
    $region34: #{tpu_custom_call.1} parent=1 // pred_check
      _
    $region35: #{tpu_custom_call.1} parent=1 // pred_check_branch
      %219 = sbr.rel (0) target = $region37
    $region36: #{tpu_custom_call.1} parent=1 // pred_region
      %221 = dma.done [#allocation3], 128
    $region37: #{tpu_custom_call.1} parent=1 // pred_fallthru
      _
    %222 = vsyncpa [#allocation3], 1

</llo_original>
